<compile_context>
chip_gen: v7x
topology: tpu7x:2x2x1
jax: 0.10.0
libtpu: 0.0.40
codegen_flags: <defaults>
</compile_context>

<pallas_src>
import jax
import jax.numpy as jnp
from jax.experimental import pallas as pl
from jax.experimental.pallas import tpu as pltpu


def _round_up(x, m):
    return (x + m - 1) // m * m


def make_rnn_agent_kernel(H, A1, A2, Np):
    """Build the fused kernel with static dims baked in.

    Bias row layout (lane-aligned segments):
      [0        : H      ]  -> b1            (fc1 bias)
      [A1       : A1+4H  ]  -> fused GRU bias (r, z, n_i, n_h order)
      [A1+A2    : A1+A2+Np] -> padded fc2 bias
    """

    def kernel(x_ref, h_ref, w1_ref, wg_ref, w2_ref, b_ref, q_ref, hout_ref):
        x = x_ref[...]
        h = h_ref[...]

        b1 = b_ref[:, 0:H]
        bg = b_ref[:, A1:A1 + 4 * H]
        b2 = b_ref[:, A1 + A2:A1 + A2 + Np]

        # fc1 + ReLU
        a = jnp.dot(x, w1_ref[...], preferred_element_type=jnp.float32) + b1
        a = jnp.maximum(a, 0.0)

        # Fused GRU: single (B, 2H) @ (2H, 4H) matmul + fused biases.
        lhs = jnp.concatenate([a, h], axis=1)                       # (B, 2H)
        g = jnp.dot(lhs, wg_ref[...], preferred_element_type=jnp.float32) + bg

        r = jax.nn.sigmoid(g[:, 0:H])
        z = jax.nn.sigmoid(g[:, H:2 * H])
        n = jnp.tanh(g[:, 2 * H:3 * H] + r * g[:, 3 * H:4 * H])
        h_new = (1.0 - z) * n + z * h

        # fc2 (lane-dense padded output, real logits live in the first cols)
        q = jnp.dot(h_new, w2_ref[...], preferred_element_type=jnp.float32) + b2

        q_ref[...] = q.astype(q_ref.dtype)
        hout_ref[...] = h_new.astype(hout_ref.dtype)

    return kernel


def pack_params(p):
    """One-time host-side packing of the raw parameter dict."""
    H = p["w1"].shape[1]
    n_actions = p["w2"].shape[1]
    Np = _round_up(n_actions, 128)       # lane-dense fc2 output width
    A1 = _round_up(H, 128)               # bias segment 1 width
    A2 = _round_up(4 * H, 128)           # bias segment 2 width

    zhh = jnp.zeros((H, H), jnp.float32)
    w_gru = jnp.concatenate(
        [
            jnp.concatenate([p["w_ir"], p["w_iz"], p["w_in"], zhh], axis=1),
            jnp.concatenate([p["w_hr"], p["w_hz"], zhh, p["w_hn"]], axis=1),
        ],
        axis=0,
    )  # (2H, 4H)

    b_gru = jnp.concatenate(
        [p["b_ir"] + p["b_hr"], p["b_iz"] + p["b_hz"], p["b_in"], p["b_hn"]],
        axis=1,
    )  # (1, 4H)

    w2p = jnp.zeros((H, Np), jnp.float32).at[:, :n_actions].set(p["w2"])
    b2p = jnp.zeros((1, Np), jnp.float32).at[:, :n_actions].set(p["b2"])

    bias = jnp.zeros((1, A1 + A2 + Np), jnp.float32)
    bias = bias.at[:, 0:H].set(p["b1"])
    bias = bias.at[:, A1:A1 + 4 * H].set(b_gru)
    bias = bias.at[:, A1 + A2:A1 + A2 + Np].set(b2p)

    return {
        "w1": p["w1"],
        "w_gru": w_gru,
        "w2p": w2p,
        "bias": bias,
        "H": H,
        "n_actions": n_actions,
        "Np": Np,
        "A1": A1,
        "A2": A2,
    }


def rnn_agent_forward(inputs, hidden_state, packed):
    """inputs: (B, input_shape), hidden_state: (..., H) -> (q, h_new)."""
    B = inputs.shape[0]
    H = packed["H"]
    Np = packed["Np"]
    h_in = hidden_state.reshape(-1, H)

    kernel = make_rnn_agent_kernel(H, packed["A1"], packed["A2"], Np)
    vmem = lambda: pl.BlockSpec(memory_space=pltpu.MemorySpace.VMEM)

    args = (inputs, h_in, packed["w1"], packed["w_gru"], packed["w2p"],
            packed["bias"])

    q_pad, h_out = pl.pallas_call(
        kernel,
        out_shape=(
            jax.ShapeDtypeStruct((B, Np), jnp.float32),
            jax.ShapeDtypeStruct((B, H), jnp.float32),
        ),
        in_specs=[vmem() for _ in args],
        out_specs=(vmem(), vmem()),
        input_output_aliases={1: 1},   # h_in buffer reused for h_out
    )(*args)

    # TODO(synk): if the agent is unrolled over a time sequence, move the time
    # loop into the kernel (grid=(T,), weights resident in VMEM, h in scratch)
    # to amortize launch + weight DMA; the module spec here is a single step.
    return q_pad[:, :packed["n_actions"]], h_out


def init_params(key, input_shape, hidden, n_actions):
    """Deterministic synthetic parameters (uniform, PyTorch-like default init)."""
    ks = jax.random.split(key, 18)

    def u(k, shape, fan_in):
        bound = 1.0 / jnp.sqrt(jnp.float32(fan_in))
        return jax.random.uniform(k, shape, jnp.float32, -bound, bound)

    p = {}
    p["w1"] = u(ks[0], (input_shape, hidden), input_shape)
    p["b1"] = u(ks[1], (1, hidden), input_shape)

    p["w_ir"] = u(ks[2], (hidden, hidden), hidden)
    p["w_iz"] = u(ks[3], (hidden, hidden), hidden)
    p["w_in"] = u(ks[4], (hidden, hidden), hidden)
    p["w_hr"] = u(ks[5], (hidden, hidden), hidden)
    p["w_hz"] = u(ks[6], (hidden, hidden), hidden)
    p["w_hn"] = u(ks[7], (hidden, hidden), hidden)
    p["b_ir"] = u(ks[8], (1, hidden), hidden)
    p["b_iz"] = u(ks[9], (1, hidden), hidden)
    p["b_in"] = u(ks[10], (1, hidden), hidden)
    p["b_hr"] = u(ks[11], (1, hidden), hidden)
    p["b_hz"] = u(ks[12], (1, hidden), hidden)
    p["b_hn"] = u(ks[13], (1, hidden), hidden)

    p["w2"] = u(ks[14], (hidden, n_actions), hidden)
    p["b2"] = u(ks[15], (1, n_actions), hidden)
    return p


def reference_forward(inputs, hidden_state, p):
    """Pure-JAX reference mirroring PyTorch RNNAgent.forward (GRUCell r,z,n)."""
    hidden = p["w1"].shape[1]
    x = jnp.maximum(inputs @ p["w1"] + p["b1"], 0.0)
    h = hidden_state.reshape(-1, hidden)
    r = jax.nn.sigmoid(x @ p["w_ir"] + p["b_ir"] + h @ p["w_hr"] + p["b_hr"])
    z = jax.nn.sigmoid(x @ p["w_iz"] + p["b_iz"] + h @ p["w_hz"] + p["b_hz"])
    n = jnp.tanh(x @ p["w_in"] + p["b_in"] + r * (h @ p["w_hn"] + p["b_hn"]))
    h_new = (1.0 - z) * n + z * h
    q = h_new @ p["w2"] + p["b2"]
    return q, h_new


if __name__ == "__main__":
    batch = 8
    input_shape = 32
    rnn_hidden_dim = 64
    n_actions = 16

    key = jax.random.PRNGKey(0)
    k_param, k_x, k_h = jax.random.split(key, 3)

    params = init_params(k_param, input_shape, rnn_hidden_dim, n_actions)
    inputs = jax.random.normal(k_x, (batch, input_shape), jnp.float32)
    hidden_state = jax.random.normal(k_h, (batch, rnn_hidden_dim), jnp.float32)

    # Pure-JAX reference (computed from the raw, unpacked params).
    q_ref, h_ref = reference_forward(inputs, hidden_state, params)

    # One-time host-side packing, then the fused Pallas kernel.
    packed = pack_params(params)
    q, h = rnn_agent_forward(inputs, hidden_state, packed)
    q = jax.block_until_ready(q)
    h = jax.block_until_ready(h)

    assert q.shape == (batch, n_actions), q.shape
    assert h.shape == (batch, rnn_hidden_dim), h.shape
    assert jnp.allclose(q, q_ref, atol=1e-5, rtol=1e-5), "q mismatch"
    assert jnp.allclose(h, h_ref, atol=1e-5, rtol=1e-5), "h mismatch"

    print("KERNEL_OK")
</pallas_src>

<mosaic_0001>
module attributes {stable_mosaic.version = 11 : i64} {
  func.func @kernel(%arg0: memref<8x32xf32, #tpu.memory_space<vmem>>, %arg1: memref<8x64xf32, #tpu.memory_space<vmem>>, %arg2: memref<32x64xf32, #tpu.memory_space<vmem>>, %arg3: memref<128x256xf32, #tpu.memory_space<vmem>>, %arg4: memref<64x128xf32, #tpu.memory_space<vmem>>, %arg5: memref<1x512xf32, #tpu.memory_space<vmem>>, %arg6: memref<8x128xf32, #tpu.memory_space<vmem>>, %arg7: memref<8x64xf32, #tpu.memory_space<vmem>>) attributes {dimension_semantics = [], scalar_prefetch = 0 : i64, scratch_operands = 0 : i64, tpu.core_type = #tpu.core_type<tc>} {
    %c0 = arith.constant 0 : index
    %c0_0 = arith.constant 0 : index
    %0 = vector.load %arg0[%c0, %c0_0] : memref<8x32xf32, #tpu.memory_space<vmem>>, vector<8x32xf32>
    %c0_1 = arith.constant 0 : index
    %c0_2 = arith.constant 0 : index
    %1 = vector.load %arg1[%c0_1, %c0_2] : memref<8x64xf32, #tpu.memory_space<vmem>>, vector<8x64xf32>
    %c0_3 = arith.constant 0 : index
    %c0_4 = arith.constant 0 : index
    %2 = vector.load %arg5[%c0_3, %c0_4] : memref<1x512xf32, #tpu.memory_space<vmem>>, vector<1x64xf32>
    %c0_5 = arith.constant 0 : index
    %c128 = arith.constant 128 : index
    %3 = vector.load %arg5[%c0_5, %c128] : memref<1x512xf32, #tpu.memory_space<vmem>>, vector<1x256xf32>
    %c0_6 = arith.constant 0 : index
    %c384 = arith.constant 384 : index
    %4 = vector.load %arg5[%c0_6, %c384] : memref<1x512xf32, #tpu.memory_space<vmem>>, vector<1x128xf32>
    %c0_7 = arith.constant 0 : index
    %c0_8 = arith.constant 0 : index
    %5 = vector.load %arg2[%c0_7, %c0_8] : memref<32x64xf32, #tpu.memory_space<vmem>>, vector<32x64xf32>
    %cst = arith.constant dense<0.000000e+00> : vector<8x64xf32>
    %6 = tpu.matmul %0, %5, %cst {dimension_numbers = #tpu.dot_dimension_numbers<[1], [0], [0], [1], [0, 0, 1, 1], [], []>} : vector<8x32xf32>, vector<32x64xf32>, vector<8x64xf32> -> vector<8x64xf32>
    %7 = vector.broadcast %2 : vector<1x64xf32> to vector<8x64xf32>
    %8 = arith.addf %6, %7 : vector<8x64xf32>
    %cst_9 = arith.constant 0.000000e+00 : f32
    %9 = vector.broadcast %cst_9 : f32 to vector<8x64xf32>
    %10 = arith.maximumf %8, %9 : vector<8x64xf32>
    %11 = tpu.concatenate %10, %1 in 1 : vector<8x64xf32>, vector<8x64xf32> -> vector<8x128xf32>
    %c0_10 = arith.constant 0 : index
    %c0_11 = arith.constant 0 : index
    %12 = vector.load %arg3[%c0_10, %c0_11] : memref<128x256xf32, #tpu.memory_space<vmem>>, vector<128x256xf32>
    %cst_12 = arith.constant dense<0.000000e+00> : vector<8x256xf32>
    %13 = tpu.matmul %11, %12, %cst_12 {dimension_numbers = #tpu.dot_dimension_numbers<[1], [0], [0], [1], [0, 0, 1, 1], [], []>} : vector<8x128xf32>, vector<128x256xf32>, vector<8x256xf32> -> vector<8x256xf32>
    %14 = vector.broadcast %3 : vector<1x256xf32> to vector<8x256xf32>
    %15 = arith.addf %13, %14 : vector<8x256xf32>
    %16 = vector.extract_strided_slice %15 {offsets = [0, 0], sizes = [8, 64], strides = [1, 1]} : vector<8x256xf32> to vector<8x64xf32>
    %17 = arith.negf %16 : vector<8x64xf32>
    %18 = math.exp %17 : vector<8x64xf32>
    %cst_13 = arith.constant 1.000000e+00 : f32
    %19 = vector.broadcast %cst_13 : f32 to vector<8x64xf32>
    %20 = arith.addf %19, %18 : vector<8x64xf32>
    %21 = arith.divf %19, %20 : vector<8x64xf32>
    %22 = vector.extract_strided_slice %15 {offsets = [0, 64], sizes = [8, 64], strides = [1, 1]} : vector<8x256xf32> to vector<8x64xf32>
    %23 = arith.negf %22 : vector<8x64xf32>
    %24 = math.exp %23 : vector<8x64xf32>
    %cst_14 = arith.constant 1.000000e+00 : f32
    %25 = vector.broadcast %cst_14 : f32 to vector<8x64xf32>
    %26 = arith.addf %25, %24 : vector<8x64xf32>
    %27 = arith.divf %25, %26 : vector<8x64xf32>
    %28 = vector.extract_strided_slice %15 {offsets = [0, 128], sizes = [8, 64], strides = [1, 1]} : vector<8x256xf32> to vector<8x64xf32>
    %29 = vector.extract_strided_slice %15 {offsets = [0, 192], sizes = [8, 64], strides = [1, 1]} : vector<8x256xf32> to vector<8x64xf32>
    %30 = arith.mulf %21, %29 : vector<8x64xf32>
    %31 = arith.addf %28, %30 : vector<8x64xf32>
    %32 = math.tanh %31 : vector<8x64xf32>
    %cst_15 = arith.constant 1.000000e+00 : f32
    %33 = vector.broadcast %cst_15 : f32 to vector<8x64xf32>
    %34 = arith.subf %33, %27 : vector<8x64xf32>
    %35 = arith.mulf %34, %32 : vector<8x64xf32>
    %36 = arith.mulf %27, %1 : vector<8x64xf32>
    %37 = arith.addf %35, %36 : vector<8x64xf32>
    %c0_16 = arith.constant 0 : index
    %c0_17 = arith.constant 0 : index
    %38 = vector.load %arg4[%c0_16, %c0_17] : memref<64x128xf32, #tpu.memory_space<vmem>>, vector<64x128xf32>
    %cst_18 = arith.constant dense<0.000000e+00> : vector<8x128xf32>
    %39 = tpu.matmul %37, %38, %cst_18 {dimension_numbers = #tpu.dot_dimension_numbers<[1], [0], [0], [1], [0, 0, 1, 1], [], []>} : vector<8x64xf32>, vector<64x128xf32>, vector<8x128xf32> -> vector<8x128xf32>
    %40 = vector.broadcast %4 : vector<1x128xf32> to vector<8x128xf32>
    %41 = arith.addf %39, %40 : vector<8x128xf32>
    %c0_19 = arith.constant 0 : index
    %c0_20 = arith.constant 0 : index
    %42 = vector.load %arg6[%c0_19, %c0_20] : memref<8x128xf32, #tpu.memory_space<vmem>>, vector<8x128xf32>
    tpu.vector_store %arg6[%c0_19, %c0_20], %41 {strides = array<i32>} : memref<8x128xf32, #tpu.memory_space<vmem>>, vector<8x128xf32>,
    %c0_21 = arith.constant 0 : index
    %c0_22 = arith.constant 0 : index
    %43 = vector.load %arg7[%c0_21, %c0_22] : memref<8x64xf32, #tpu.memory_space<vmem>>, vector<8x64xf32>
    tpu.vector_store %arg7[%c0_21, %c0_22], %37 {strides = array<i32>} : memref<8x64xf32, #tpu.memory_space<vmem>>, vector<8x64xf32>,
    return
  }
}

</mosaic_0001>

<llo_original>
// kernel: tpu_custom_call.1
$region0: #{tpu_custom_call.1}
  #allocation0 [shape = 'u32[]', space=smem, size = 0x4, offset = 0x4, fixed_abs, tag = 'smem constant byte address 0x4 - core index']
  #allocation1 [shape = 'u32[144,128]{1,0:T(1,128)}', space=vmem, size = 0x12000, scoped, tag = 'internal scratch']
  %s0 = inlined_call_operand.vmem [shape: f32[8,32], index: 0, kind: input, shape index: {}]
  %s1 = inlined_call_operand.hbm [shape: f32[8,64], index: 1, kind: input, shape index: {}, may-alias: {1,7}]
  %s2 = inlined_call_operand.hbm [shape: f32[32,64], index: 2, kind: input, shape index: {}]
  %s3 = inlined_call_operand.hbm [shape: f32[128,256], index: 3, kind: input, shape index: {}]
  %s4 = inlined_call_operand.hbm [shape: f32[64,128], index: 4, kind: input, shape index: {}]
  %s5 = inlined_call_operand.vmem [shape: f32[1,512], index: 5, kind: input, shape index: {}]
  %s6 = inlined_call_operand.hbm [shape: f32[8,128], index: 6, kind: output, shape index: {0}]
  %s7 = inlined_call_operand.hbm [shape: f32[8,64], index: 7, kind: output, shape index: {1}, may-alias: {1,7}]
  %8 = xla_tuple %s6, %s7
  %s9 = sld [smem:[#allocation0]]
  $region58: #{tpu_custom_call.1} parent=0
    _
  %s11 = ssub.s32 1, %s9
  %s12 = scalar_select 0, %s11, %s9
  $region1: #{tpu_custom_call.1} parent=0
    #allocation2 [shape = 'u8[4096]{0}', space=vmem, size = 0x1000, scoped, tag = 'input window, operand 1, single buffered']
    #allocation3 [shape = 's32[1]{0}', space=sflag, size = 0x4, scoped, tag = 'scoped memory for tpu_custom_call.1']
    #allocation4 [shape = 's32[1]{0}', space=sflag, size = 0x4, scoped, tag = 'scoped memory for tpu_custom_call.1']
    #allocation5 [shape = 'u8[16384]{0}', space=vmem, size = 0x4000, scoped, tag = 'input window, operand 2, single buffered']
    #allocation6 [shape = 's32[1]{0}', space=sflag, size = 0x4, scoped, tag = 'scoped memory for tpu_custom_call.1']
    #allocation7 [shape = 'u8[131072]{0}', space=vmem, size = 0x20000, scoped, tag = 'input window, operand 3, single buffered']
    #allocation8 [shape = 'u8[32768]{0}', space=vmem, size = 0x8000, scoped, tag = 'input window, operand 4, single buffered']
    #allocation9 [shape = 's32[1]{0}', space=sflag, size = 0x4, scoped, tag = 'scoped memory for tpu_custom_call.1']
    #allocation10 [shape = 'u8[4096]{0}', space=vmem, size = 0x1000, scoped, tag = 'output window, operand 0, single buffered']
    #allocation11 [shape = 'u8[4096]{0}', space=vmem, size = 0x1000, scoped, tag = 'output window, operand 1, single buffered']
    #allocation12 [shape = 's32[1]{0}', space=sflag, size = 0x4, scoped, tag = 'scoped memory for tpu_custom_call.1']
    %13 = vsyncpa [#allocation3], 0
    %14 = vsyncpa [#allocation6], 0
    %15 = vsyncpa [#allocation9], 0
    %16 = vsyncpa [#allocation4], 0
    %17 = vsyncpa [#allocation12], 0
    // Predicated region
    $region2: #{tpu_custom_call.1} parent=1 // pred_check
      _
    $region3: #{tpu_custom_call.1} parent=1 // pred_check_branch
      %19 = sbr.rel (0) target = $region5
    $region4: #{tpu_custom_call.1} parent=1 // pred_region
      _
    $region5: #{tpu_custom_call.1} parent=1 // pred_fallthru
      _
    // Predicated region
    $region6: #{tpu_custom_call.1} parent=1 // pred_check
      _
    $region7: #{tpu_custom_call.1} parent=1 // pred_check_branch
      %21 = sbr.rel (0) target = $region9
    $region8: #{tpu_custom_call.1} parent=1 // pred_region
      %s23 = ssub.s32 128, 128
      %24 = vsyncadd [#allocation3], %s23
      %s26 = sshll.u32 [#allocation2], 4
      %s27 = int_to_ptr.vmem [resolvable:$true] %s26
      %29 = dma.hbm_to_vmem [thread:$0]  %s1, 128, %s27, [#allocation3]
    $region9: #{tpu_custom_call.1} parent=1 // pred_fallthru
      _
    // Predicated region
    $region10: #{tpu_custom_call.1} parent=1 // pred_check
      _
    $region11: #{tpu_custom_call.1} parent=1 // pred_check_branch
      %31 = sbr.rel (0) target = $region13
    $region12: #{tpu_custom_call.1} parent=1 // pred_region
      %s33 = ssub.s32 512, 512
      %34 = vsyncadd [#allocation6], %s33
      %s35 = sshll.u32 [#allocation5], 4
      %s36 = int_to_ptr.vmem [resolvable:$true] %s35
      %41 = dma.hbm_to_vmem [thread:$0]  %s2, 512, %s36, [#allocation6], 128, 128, 8
    $region13: #{tpu_custom_call.1} parent=1 // pred_fallthru
      _
    // Predicated region
    $region14: #{tpu_custom_call.1} parent=1 // pred_check
      _
    $region15: #{tpu_custom_call.1} parent=1 // pred_check_branch
      %43 = sbr.rel (0) target = $region17
    $region16: #{tpu_custom_call.1} parent=1 // pred_region
      %s45 = ssub.s32 4096, 4096
      %46 = vsyncadd [#allocation6], %s45
      %s47 = sshll.u32 [#allocation7], 4
      %s48 = int_to_ptr.vmem [resolvable:$true] %s47
      %53 = dma.hbm_to_vmem [thread:$0]  %s3, 4096, %s48, [#allocation6], 256, 256, 16
    $region17: #{tpu_custom_call.1} parent=1 // pred_fallthru
      _
    // Predicated region
    $region18: #{tpu_custom_call.1} parent=1 // pred_check
      _
    $region19: #{tpu_custom_call.1} parent=1 // pred_check_branch
      %55 = sbr.rel (0) target = $region21
    $region20: #{tpu_custom_call.1} parent=1 // pred_region
      %s57 = ssub.s32 1024, 1024
      %58 = vsyncadd [#allocation9], %s57
      %s59 = sshll.u32 [#allocation8], 4
      %s60 = int_to_ptr.vmem [resolvable:$true] %s59
      %65 = dma.hbm_to_vmem [thread:$0]  %s4, 1024, %s60, [#allocation9], 128, 128, 8
    $region21: #{tpu_custom_call.1} parent=1 // pred_fallthru
      _
    // Predicated region
    $region22: #{tpu_custom_call.1} parent=1 // pred_check
      _
    $region23: #{tpu_custom_call.1} parent=1 // pred_check_branch
      %67 = sbr.rel (0) target = $region25
    $region24: #{tpu_custom_call.1} parent=1 // pred_region
      _
    $region25: #{tpu_custom_call.1} parent=1 // pred_fallthru
      _
    // Predicated region
    $region26: #{tpu_custom_call.1} parent=1 // pred_check
      _
    $region27: #{tpu_custom_call.1} parent=1 // pred_check_branch
      %69 = sbr.rel (0) target = $region29
    $region28: #{tpu_custom_call.1} parent=1 // pred_region
      %70 = dma.done [#allocation3], 128
    $region29: #{tpu_custom_call.1} parent=1 // pred_fallthru
      _
    // Predicated region
    $region30: #{tpu_custom_call.1} parent=1 // pred_check
      _
    $region31: #{tpu_custom_call.1} parent=1 // pred_check_branch
      %72 = sbr.rel (0) target = $region33
    $region32: #{tpu_custom_call.1} parent=1 // pred_region
      %73 = dma.done [#allocation6], 512
    $region33: #{tpu_custom_call.1} parent=1 // pred_fallthru
      _
    // Predicated region
    $region34: #{tpu_custom_call.1} parent=1 // pred_check
      _
    $region35: #{tpu_custom_call.1} parent=1 // pred_check_branch
      %75 = sbr.rel (0) target = $region37
    $region36: #{tpu_custom_call.1} parent=1 // pred_region
      %76 = dma.done [#allocation6], 4096
    $region37: #{tpu_custom_call.1} parent=1 // pred_fallthru
      _
    // Predicated region
    $region38: #{tpu_custom_call.1} parent=1 // pred_check
      _
    $region39: #{tpu_custom_call.1} parent=1 // pred_check_branch
      %78 = sbr.rel (0) target = $region41
    $region40: #{tpu_custom_call.1} parent=1 // pred_region
      %79 = dma.done [#allocation9], 1024
    $region41: #{tpu_custom_call.1} parent=1 // pred_fallthru
      _
    %v80 = vld [vmem:[%s0] sm:$0xff]
    %v81 = vld [vmem:[#allocation2] sm:$0xff]
    %v82 = vld [vmem:[%s5] sm:$0x1]
    %v83 = vld [vmem:[%s5 + $0x1] sm:$0x3]
    %v84 = vld [vmem:[%s5 + $0x3] sm:$0x1]
    %v85 = vld [vmem:[#allocation5] sm:$0xff]
    %v86 = vld [vmem:[#allocation5 + $0x8] sm:$0xff]
    %v87 = vld [vmem:[#allocation5 + $0x10] sm:$0xff]
    %v88 = vld [vmem:[#allocation5 + $0x18] sm:$0xff]
    %v90 = vlaneseq
    %v91 = vshrl.u32 %v90, 7
    %v92 = vsub.s32 0, %v91
    %v93 = vrot.slane %v82, %v92
    %vm95 = vcmask 261120
    %v97 = vsel %vm95, %v80, 0
    %99 = vmatprep.subr.mxu0 0.0
    %100 = vmatpush1.msra.mxu0 %v85
    %101 = vmatprep.subr.mxu0 0.0
    %102 = vmatpush1.msra.mxu0 %v86
    %103 = vmatprep.subr.mxu0 0.0
    %104 = vmatpush1.msra.mxu0 %v87
    %105 = vmatprep.subr.mxu0 0.0
    %106 = vmatpush1.msra.mxu0 %v88
    %107 = vmatprep.subr.mxu0 0.0
    %108 = vmatpush1.msra.mxu0 0.0
    %109 = vmatprep.subr.mxu0 0.0
    %110 = vmatpush1.msra.mxu0 0.0
    %111 = vmatprep.subr.mxu0 0.0
    %112 = vmatpush1.msra.mxu0 0.0
    %113 = vmatprep.subr.mxu0 0.0
    %114 = vmatpush1.msra.mxu0 0.0
    %115 = vmatprep.subr.mxu0 0.0
    %116 = vmatpush1.msra.mxu0 0.0
    %117 = vmatprep.subr.mxu0 0.0
    %118 = vmatpush1.msra.mxu0 0.0
    %119 = vmatprep.subr.mxu0 0.0
    %120 = vmatpush1.msra.mxu0 0.0
    %121 = vmatprep.subr.mxu0 0.0
    %122 = vmatpush1.msra.mxu0 0.0
    %123 = vmatprep.subr.mxu0 0.0
    %124 = vmatpush1.msra.mxu0 0.0
    %125 = vmatprep.subr.mxu0 0.0
    %126 = vmatpush1.msra.mxu0 0.0
    %127 = vmatprep.subr.mxu0 0.0
    %128 = vmatpush1.msra.mxu0 0.0
    %129 = vmatprep.subr.mxu0 0.0
    %130 = vmatpush1.msra.mxu0 0.0
    %131 = vmatprep.subr.mxu0 0.0
    %132 = vmatpush1.msra.mxu0 0.0
    %133 = vmatprep.subr.mxu0 0.0
    %134 = vmatpush1.msra.mxu0 0.0
    %135 = vmatprep.subr.mxu0 0.0
    %136 = vmatpush1.msra.mxu0 0.0
    %137 = vmatprep.subr.mxu0 0.0
    %138 = vmatpush1.msra.mxu0 0.0
    %139 = vmatprep.subr.mxu0 0.0
    %140 = vmatpush1.msra.mxu0 0.0
    %141 = vmatprep.subr.mxu0 0.0
    %142 = vmatpush1.msra.mxu0 0.0
    %143 = vmatprep.subr.mxu0 0.0
    %144 = vmatpush1.msra.mxu0 0.0
    %145 = vmatprep.subr.mxu0 0.0
    %146 = vmatpush1.msra.mxu0 0.0
    %147 = vmatprep.subr.mxu0 0.0
    %148 = vmatpush1.msra.mxu0 0.0
    %149 = vmatprep.subr.mxu0 0.0
    %150 = vmatpush1.msra.mxu0 0.0
    %151 = vmatprep.subr.mxu0 0.0
    %152 = vmatpush1.msra.mxu0 0.0
    %153 = vmatprep.subr.mxu0 0.0
    %154 = vmatpush1.msra.mxu0 0.0
    %155 = vmatprep.subr.mxu0 0.0
    %156 = vmatpush1.msra.mxu0 0.0
    %157 = vmatprep.subr.mxu0 0.0
    %158 = vmatpush1.msra.mxu0 0.0
    %159 = vmatprep.subr.mxu0 0.0
    %160 = vmatpush1.msra.mxu0 0.0
    %161 = vmatprep.subr.mxu0 0.0
    %162 = vmatpush1.msra.mxu0 0.0
    %163 = vmatprep.mubr.f32.mxu0 0.0
    %164 = vmatmul.mubr.f32.gmra.mrb[0].mxu0 %v97
    %v165 = vpop.f32.mrb[0].mxu0
    %v166 = vadd.f32 %v93, %v165
    %v167 = vpop.f32.mrb[0].mxu0
    %168 = vdwg.mxu0
    %v169 = vmax.f32 %v166, 0.0
    %171 = vrot.lane.b32.xlu0 %v81, 64
    %v172 = vpop.permute.xlu0 %171
    %vm174 = vcmask 523264
    %v175 = vsel %vm174, %v169, %v172
    %v176 = vld [vmem:[#allocation7] sm:$0xff]
    %v177 = vld [vmem:[#allocation7 + $0x8] sm:$0xff]
    %v178 = vld [vmem:[#allocation7 + $0x10] sm:$0xff]
    %v179 = vld [vmem:[#allocation7 + $0x18] sm:$0xff]
    %v180 = vld [vmem:[#allocation7 + $0x20] sm:$0xff]
    %v181 = vld [vmem:[#allocation7 + $0x28] sm:$0xff]
    %v182 = vld [vmem:[#allocation7 + $0x30] sm:$0xff]
    %v183 = vld [vmem:[#allocation7 + $0x38] sm:$0xff]
    %v184 = vld [vmem:[#allocation7 + $0x40] sm:$0xff]
    %v185 = vld [vmem:[#allocation7 + $0x48] sm:$0xff]
    %v186 = vld [vmem:[#allocation7 + $0x50] sm:$0xff]
    %v187 = vld [vmem:[#allocation7 + $0x58] sm:$0xff]
    %v188 = vld [vmem:[#allocation7 + $0x60] sm:$0xff]
    %v189 = vld [vmem:[#allocation7 + $0x68] sm:$0xff]
    %v190 = vld [vmem:[#allocation7 + $0x70] sm:$0xff]
    %v191 = vld [vmem:[#allocation7 + $0x78] sm:$0xff]
    %v192 = vld [vmem:[#allocation7 + $0x80] sm:$0xff]
    %v193 = vld [vmem:[#allocation7 + $0x88] sm:$0xff]
    %v194 = vld [vmem:[#allocation7 + $0x90] sm:$0xff]
    %v195 = vld [vmem:[#allocation7 + $0x98] sm:$0xff]
    %v196 = vld [vmem:[#allocation7 + $0xa0] sm:$0xff]
    %v197 = vld [vmem:[#allocation7 + $0xa8] sm:$0xff]
    %v198 = vld [vmem:[#allocation7 + $0xb0] sm:$0xff]
    %v199 = vld [vmem:[#allocation7 + $0xb8] sm:$0xff]
    %v200 = vld [vmem:[#allocation7 + $0xc0] sm:$0xff]
    %v201 = vld [vmem:[#allocation7 + $0xc8] sm:$0xff]
    %v202 = vld [vmem:[#allocation7 + $0xd0] sm:$0xff]
    %v203 = vld [vmem:[#allocation7 + $0xd8] sm:$0xff]
    %v204 = vld [vmem:[#allocation7 + $0xe0] sm:$0xff]
    %v205 = vld [vmem:[#allocation7 + $0xe8] sm:$0xff]
    %v206 = vld [vmem:[#allocation7 + $0xf0] sm:$0xff]
    %v207 = vld [vmem:[#allocation7 + $0xf8] sm:$0xff]
    %v209 = vlaneseq
    %v210 = vshrl.u32 %v209, 7
    %v211 = vsub.s32 0, %v210
    %v212 = vrot.slane %v83, %v211
    %v213 = vlaneseq
    %v214 = vshrl.u32 %v213, 7
    %v215 = vsub.s32 1, %v214
    %v216 = vrot.slane %v83, %v215
    %219 = vmatprep.subr.mxu0 %v177
    %220 = vmatpush1.msra.mxu0 %v176
    %221 = vmatprep.subr.mxu0 %v179
    %222 = vmatpush1.msra.mxu0 %v178
    %223 = vmatprep.subr.mxu0 %v181
    %224 = vmatpush1.msra.mxu0 %v180
    %225 = vmatprep.subr.mxu0 %v183
    %226 = vmatpush1.msra.mxu0 %v182
    %227 = vmatprep.subr.mxu0 %v185
    %228 = vmatpush1.msra.mxu0 %v184
    %229 = vmatprep.subr.mxu0 %v187
    %230 = vmatpush1.msra.mxu0 %v186
    %231 = vmatprep.subr.mxu0 %v189
    %232 = vmatpush1.msra.mxu0 %v188
    %233 = vmatprep.subr.mxu0 %v191
    %234 = vmatpush1.msra.mxu0 %v190
    %235 = vmatprep.subr.mxu0 %v193
    %236 = vmatpush1.msra.mxu0 %v192
    %237 = vmatprep.subr.mxu0 %v195
    %238 = vmatpush1.msra.mxu0 %v194
    %239 = vmatprep.subr.mxu0 %v197
    %240 = vmatpush1.msra.mxu0 %v196
    %241 = vmatprep.subr.mxu0 %v199
    %242 = vmatpush1.msra.mxu0 %v198
    %243 = vmatprep.subr.mxu0 %v201
    %244 = vmatpush1.msra.mxu0 %v200
    %245 = vmatprep.subr.mxu0 %v203
    %246 = vmatpush1.msra.mxu0 %v202
    %247 = vmatprep.subr.mxu0 %v205
    %248 = vmatpush1.msra.mxu0 %v204
    %249 = vmatprep.subr.mxu0 %v207
    %250 = vmatpush1.msra.mxu0 %v206
    %251 = vmatprep.subr.mxu0 0.0
    %252 = vmatpush1.msra.mxu0 0.0
    %253 = vmatprep.subr.mxu0 0.0
    %254 = vmatpush1.msra.mxu0 0.0
    %255 = vmatprep.subr.mxu0 0.0
    %256 = vmatpush1.msra.mxu0 0.0
    %257 = vmatprep.subr.mxu0 0.0
    %258 = vmatpush1.msra.mxu0 0.0
    %259 = vmatprep.subr.mxu0 0.0
    %260 = vmatpush1.msra.mxu0 0.0
    %261 = vmatprep.subr.mxu0 0.0
    %262 = vmatpush1.msra.mxu0 0.0
    %263 = vmatprep.subr.mxu0 0.0
    %264 = vmatpush1.msra.mxu0 0.0
    %265 = vmatprep.subr.mxu0 0.0
    %266 = vmatpush1.msra.mxu0 0.0
    %267 = vmatprep.subr.mxu0 0.0
    %268 = vmatpush1.msra.mxu0 0.0
    %269 = vmatprep.subr.mxu0 0.0
    %270 = vmatpush1.msra.mxu0 0.0
    %271 = vmatprep.subr.mxu0 0.0
    %272 = vmatpush1.msra.mxu0 0.0
    %273 = vmatprep.subr.mxu0 0.0
    %274 = vmatpush1.msra.mxu0 0.0
    %275 = vmatprep.subr.mxu0 0.0
    %276 = vmatpush1.msra.mxu0 0.0
    %277 = vmatprep.subr.mxu0 0.0
    %278 = vmatpush1.msra.mxu0 0.0
    %279 = vmatprep.subr.mxu0 0.0
    %280 = vmatpush1.msra.mxu0 0.0
    %281 = vmatprep.subr.mxu0 0.0
    %282 = vmatpush1.msra.mxu0 0.0
    %283 = vmatprep.mubr.f32.mxu0 0.0
    %284 = vmatmul.mubr.f32.gmra.mrb[0].mxu0 %v175
    %v285 = vpop.f32.mrb[0].mxu0
    %v286 = vadd.f32 %v212, %v285
    %v287 = vpop.f32.mrb[0].mxu0
    %v288 = vadd.f32 %v216, %v287
    %289 = vdwg.mxu0
    %v290 = vxor.u32 %v286, 2147483648
    %v291 = vmul.f32 %v290, 1.442695
    %v292 = vpow.pop %v291
    %v293 = vadd.f32 %v292, 1.0
    %v294 = vrcp.pop %v293
    %v295 = vmul.f32 1.0, %v294
    %297 = vrot.lane.b32.xlu0 %v288, 64
    %v298 = vpop.permute.xlu0 %297
    %v300 = vmul.f32 %v295, %v298
    %v301 = vadd.f32 %v288, %v300
    %v302 = vtanh.pop %v301
    %v303 = vsub.f32 1.0, %v295
    %305 = vrot.lane.b32.xlu0 %v302, 64
    %v306 = vpop.permute.xlu0 %305
    %v308 = vmul.f32 %v303, %v306
    %v309 = vmul.f32 %v295, %v172
    %v310 = vadd.f32 %v308, %v309
    %v311 = vld [vmem:[#allocation8] sm:$0xff]
    %v312 = vld [vmem:[#allocation8 + $0x8] sm:$0xff]
    %v313 = vld [vmem:[#allocation8 + $0x10] sm:$0xff]
    %v314 = vld [vmem:[#allocation8 + $0x18] sm:$0xff]
    %v315 = vld [vmem:[#allocation8 + $0x20] sm:$0xff]
    %v316 = vld [vmem:[#allocation8 + $0x28] sm:$0xff]
    %v317 = vld [vmem:[#allocation8 + $0x30] sm:$0xff]
    %v318 = vld [vmem:[#allocation8 + $0x38] sm:$0xff]
    %v320 = vlaneseq
    %v321 = vshrl.u32 %v320, 7
    %v322 = vsub.s32 0, %v321
    %v323 = vrot.slane %v84, %v322
    %326 = vrot.lane.b32.xlu0 %v310, 64
    %v327 = vpop.permute.xlu0 %326
    %v328 = vsel %vm174, %v327, 0
    %330 = vmatprep.subr.mxu0 0.0
    %331 = vmatpush1.msra.mxu0 %v311
    %332 = vmatprep.subr.mxu0 0.0
    %333 = vmatpush1.msra.mxu0 %v312
    %334 = vmatprep.subr.mxu0 0.0
    %335 = vmatpush1.msra.mxu0 %v313
    %336 = vmatprep.subr.mxu0 0.0
    %337 = vmatpush1.msra.mxu0 %v314
    %338 = vmatprep.subr.mxu0 0.0
    %339 = vmatpush1.msra.mxu0 %v315
    %340 = vmatprep.subr.mxu0 0.0
    %341 = vmatpush1.msra.mxu0 %v316
    %342 = vmatprep.subr.mxu0 0.0
    %343 = vmatpush1.msra.mxu0 %v317
    %344 = vmatprep.subr.mxu0 0.0
    %345 = vmatpush1.msra.mxu0 %v318
    %346 = vmatprep.subr.mxu0 0.0
    %347 = vmatpush1.msra.mxu0 0.0
    %348 = vmatprep.subr.mxu0 0.0
    %349 = vmatpush1.msra.mxu0 0.0
    %350 = vmatprep.subr.mxu0 0.0
    %351 = vmatpush1.msra.mxu0 0.0
    %352 = vmatprep.subr.mxu0 0.0
    %353 = vmatpush1.msra.mxu0 0.0
    %354 = vmatprep.subr.mxu0 0.0
    %355 = vmatpush1.msra.mxu0 0.0
    %356 = vmatprep.subr.mxu0 0.0
    %357 = vmatpush1.msra.mxu0 0.0
    %358 = vmatprep.subr.mxu0 0.0
    %359 = vmatpush1.msra.mxu0 0.0
    %360 = vmatprep.subr.mxu0 0.0
    %361 = vmatpush1.msra.mxu0 0.0
    %362 = vmatprep.subr.mxu0 0.0
    %363 = vmatpush1.msra.mxu0 0.0
    %364 = vmatprep.subr.mxu0 0.0
    %365 = vmatpush1.msra.mxu0 0.0
    %366 = vmatprep.subr.mxu0 0.0
    %367 = vmatpush1.msra.mxu0 0.0
    %368 = vmatprep.subr.mxu0 0.0
    %369 = vmatpush1.msra.mxu0 0.0
    %370 = vmatprep.subr.mxu0 0.0
    %371 = vmatpush1.msra.mxu0 0.0
    %372 = vmatprep.subr.mxu0 0.0
    %373 = vmatpush1.msra.mxu0 0.0
    %374 = vmatprep.subr.mxu0 0.0
    %375 = vmatpush1.msra.mxu0 0.0
    %376 = vmatprep.subr.mxu0 0.0
    %377 = vmatpush1.msra.mxu0 0.0
    %378 = vmatprep.subr.mxu0 0.0
    %379 = vmatpush1.msra.mxu0 0.0
    %380 = vmatprep.subr.mxu0 0.0
    %381 = vmatpush1.msra.mxu0 0.0
    %382 = vmatprep.subr.mxu0 0.0
    %383 = vmatpush1.msra.mxu0 0.0
    %384 = vmatprep.subr.mxu0 0.0
    %385 = vmatpush1.msra.mxu0 0.0
    %386 = vmatprep.subr.mxu0 0.0
    %387 = vmatpush1.msra.mxu0 0.0
    %388 = vmatprep.subr.mxu0 0.0
    %389 = vmatpush1.msra.mxu0 0.0
    %390 = vmatprep.subr.mxu0 0.0
    %391 = vmatpush1.msra.mxu0 0.0
    %392 = vmatprep.subr.mxu0 0.0
    %393 = vmatpush1.msra.mxu0 0.0
    %394 = vmatprep.mubr.f32.mxu0 0.0
    %395 = vmatmul.mubr.f32.gmra.mrb[0].mxu0 %v328
    %v396 = vpop.f32.mrb[0].mxu0
    %v397 = vadd.f32 %v323, %v396
    %v398 = vpop.f32.mrb[0].mxu0
    %399 = vdwg.mxu0
    %400 = vst [vmem:[#allocation10] sm:$0xff] %v397
    %402 = vst.msk [vmem:[#allocation11] sm:$0xff] %vm174, %v327
    // Predicated region
    $region42: #{tpu_custom_call.1} parent=1 // pred_check
      _
    $region43: #{tpu_custom_call.1} parent=1 // pred_check_branch
      %404 = sbr.rel (0) target = $region45
    $region44: #{tpu_custom_call.1} parent=1 // pred_region
      %s406 = ssub.s32 128, 128
      %407 = vsyncadd [#allocation4], %s406
      %s409 = sshll.u32 [#allocation10], 4
      %s410 = int_to_ptr.vmem [resolvable:$true] %s409
      %412 = dma.vmem_to_hbm [thread:$0]  %s410, 128, %s6, [#allocation4]
    $region45: #{tpu_custom_call.1} parent=1 // pred_fallthru
      _
    // Predicated region
    $region46: #{tpu_custom_call.1} parent=1 // pred_check
      _
    $region47: #{tpu_custom_call.1} parent=1 // pred_check_branch
      %414 = sbr.rel (0) target = $region49
    $region48: #{tpu_custom_call.1} parent=1 // pred_region
      %s416 = ssub.s32 128, 128
      %417 = vsyncadd [#allocation12], %s416
      %s419 = sshll.u32 [#allocation11], 4
      %s420 = int_to_ptr.vmem [resolvable:$true] %s419
      %422 = dma.vmem_to_hbm [thread:$0]  %s420, 128, %s7, [#allocation12]
    $region49: #{tpu_custom_call.1} parent=1 // pred_fallthru
      _
    // Predicated region
    $region50: #{tpu_custom_call.1} parent=1 // pred_check
      _
    $region51: #{tpu_custom_call.1} parent=1 // pred_check_branch
      %424 = sbr.rel (0) target = $region53
    $region52: #{tpu_custom_call.1} parent=1 // pred_region
      %425 = dma.done [#allocation4], 128
    $region53: #{tpu_custom_call.1} parent=1 // pred_fallthru
      _
    // Predicated region
    $region54: #{tpu_custom_call.1} parent=1 // pred_check
      _
    $region55: #{tpu_custom_call.1} parent=1 // pred_check_branch
      %427 = sbr.rel (0) target = $region57
    $region56: #{tpu_custom_call.1} parent=1 // pred_region
      %428 = dma.done [#allocation12], 128
    $region57: #{tpu_custom_call.1} parent=1 // pred_fallthru
      _
    %429 = vsyncpa [#allocation3], 1
    %430 = vsyncpa [#allocation6], 1
    %431 = vsyncpa [#allocation9], 1
    %432 = vsyncpa [#allocation4], 1
    %433 = vsyncpa [#allocation12], 1

</llo_original>
